<compile_context>
chip_gen: v6e
topology: v6e:2x2x1
jax: 0.10.0
libtpu: 0.0.40
codegen_flags: <defaults>
</compile_context>

<pallas_src>
import functools

import jax
import jax.numpy as jnp
from jax import lax
from jax.experimental import pallas as pl
from jax.experimental.pallas import tpu as pltpu


def _round_up(x, m):
    return ((x + m - 1) // m) * m


_MAX_TK = 4096                # lane-aligned cap on the K tile width
_TK_VMEM_BUDGET = 20 << 20    # conservative streamed+resident budget (all gens)


def _pick_tk(m, k, itemsize):
    """Largest lane-aligned K tile that fits VMEM, keeping >=~4 K steps."""
    if k <= 512:
        # Single tile covering all of K.  block dim == full array dim is
        # always legal (even when k is not a multiple of 128); no ragged tail.
        return k
    resident = 3 * m * m * 4                       # acc / target / output (f32)
    avail = max(_TK_VMEM_BUDGET - resident, 2 * m * 256 * itemsize)
    tk = min(_MAX_TK, max(128, (avail // (2 * m * itemsize)) // 128 * 128))
    # Keep at least ~4 K steps so the streamed-tile DMA overlaps the MXU.
    while tk > 512 and -(-k // tk) < 4:
        tk //= 2
    return min(tk, _round_up(k, 128))


def _feat_in_spec(m, tk, nk):
    """Streamed (M, TK) feature tiles; deeper pipeline when enough K steps."""
    if nk >= 3:
        return pl.BlockSpec((m, tk), lambda ki: (0, ki),
                            pipeline_mode=pl.Buffered(3))
    return pl.BlockSpec((m, tk), lambda ki: (0, ki))


def _vmem_limit_bytes(m, tk, itemsize, nk, n_resident_f32_blocks):
    """Explicit scoped-VMEM request sized from the actual buffer footprint."""
    bufs = 3 if nk >= 3 else 2
    need = bufs * m * tk * itemsize + n_resident_f32_blocks * m * m * 4
    need = need + need // 4 + (1 << 20)            # headroom for compiler scratch
    return int(min(max(need, 8 << 20), 64 << 20))  # 64 MiB = v7x physical


def _masked_tile(f_ref, ki, k_total, tk, ragged):
    """Load the current (M, TK) tile; zero ragged K-tail columns if needed."""
    f = f_ref[...]
    if ragged:  # compile-time gate; mask is cheap VPU work hidden under MXU/DMA
        rem = k_total - ki * tk                      # valid columns in this tile
        col = lax.broadcasted_iota(jnp.int32, f.shape, dimension=1)
        f = jnp.where(col < rem, f, jnp.zeros_like(f))
    return f


# ----------------------------------------------------------------------------
# Kernels
# ----------------------------------------------------------------------------
def _gram_kernel(f_ref, g_ref, *, inv_norm, k_total, tk, ragged):
    """Accumulate F_k @ F_k^T directly into the resident output block."""
    ki = pl.program_id(0)

    @pl.when(ki == 0)
    def _():
        g_ref[...] = jnp.zeros_like(g_ref)

    f = _masked_tile(f_ref, ki, k_total, tk, ragged)
    # Contract last axes of both operands (== F @ F.T); same lowering as
    # pl.dot(f, f, trans_b=True) — no explicit transpose / XLU traffic.
    g_ref[...] += lax.dot_general(
        f, f,
        dimension_numbers=(((1,), (1,)), ((), ())),
        preferred_element_type=jnp.float32,
    )

    @pl.when(ki == pl.num_programs(0) - 1)
    def _():
        g_ref[...] = g_ref[...] * inv_norm


def _style_loss_kernel(f_ref, tgt_ref, loss_ref, acc_ref,
                       *, inv_norm, inv_mm, k_total, tk, ragged):
    """Same K-tiled Gram accumulation; finalize emits only MSE(G, target)."""
    ki = pl.program_id(0)

    @pl.when(ki == 0)
    def _():
        acc_ref[...] = jnp.zeros_like(acc_ref)

    f = _masked_tile(f_ref, ki, k_total, tk, ragged)
    acc_ref[...] += lax.dot_general(
        f, f,
        dimension_numbers=(((1,), (1,)), ((), ())),
        preferred_element_type=jnp.float32,
    )

    @pl.when(ki == pl.num_programs(0) - 1)
    def _():
        diff = acc_ref[...] * inv_norm - tgt_ref[...]
        # mean over all M*M gram elements (F.mse_loss default); multiply by a
        # precomputed constant instead of dividing.
        loss_ref[0] = jnp.sum(diff * diff) * inv_mm


# ----------------------------------------------------------------------------
# Wrappers
# ----------------------------------------------------------------------------
def _prep_features(x, stream_dtype):
    """NCHW -> (M, K) feature matrix (no padding, no extra HBM copy)."""
    a, b, c, d = x.shape
    m, k = a * b, c * d
    feats = x.reshape(m, k)
    if stream_dtype is not None and feats.dtype != stream_dtype:
        # Halves streamed HBM bytes for f32 inputs; MXU still accumulates in
        # f32.  Under jit this cast fuses into the feature-map producer.
        feats = feats.astype(stream_dtype)
    tk = _pick_tk(m, k, feats.dtype.itemsize)
    nk = -(-k // tk)
    ragged = (k % tk) != 0
    return feats, m, k, tk, nk, ragged


def gram_matrix(x, stream_dtype=jnp.bfloat16):
    """x: (a, b, c, d) NCHW -> gram matrix (a*b, a*b), float32."""
    feats, m, k, tk, nk, ragged = _prep_features(x, stream_dtype)
    inv_norm = 1.0 / float(m * k)                    # 1 / (a*b*c*d)
    itemsize = feats.dtype.itemsize

    kernel = functools.partial(_gram_kernel, inv_norm=inv_norm,
                               k_total=k, tk=tk, ragged=ragged)
    return pl.pallas_call(
        kernel,
        out_shape=jax.ShapeDtypeStruct((m, m), jnp.float32),
        grid_spec=pltpu.PrefetchScalarGridSpec(
            num_scalar_prefetch=0,
            grid=(nk,),
            in_specs=[_feat_in_spec(m, tk, nk)],
            # Constant index_map across k -> output block stays resident in
            # VMEM and doubles as the f32 accumulator (no scratch needed).
            out_specs=pl.BlockSpec((m, m), lambda ki: (0, 0)),
        ),
        compiler_params=pltpu.CompilerParams(
            dimension_semantics=("arbitrary",),
            vmem_limit_bytes=_vmem_limit_bytes(m, tk, itemsize, nk, 2)),
        cost_estimate=pl.CostEstimate(
            flops=2 * m * m * k,
            transcendentals=0,
            bytes_accessed=m * k * itemsize + m * m * 4),
    )(feats)


def style_loss_forward(x, target_gram, stream_dtype=jnp.bfloat16):
    """StyleLoss.forward: returns (input_unchanged, mse_loss).

    target_gram must be the (a*b, a*b) float32 Gram of the target feature
    (precomputed once in StyleLoss.__init__; no per-call cast/pad work).
    """
    feats, m, k, tk, nk, ragged = _prep_features(x, stream_dtype)
    inv_norm = 1.0 / float(m * k)
    inv_mm = 1.0 / float(m * m)
    itemsize = feats.dtype.itemsize

    kernel = functools.partial(_style_loss_kernel, inv_norm=inv_norm,
                               inv_mm=inv_mm, k_total=k, tk=tk, ragged=ragged)
    loss = pl.pallas_call(
        kernel,
        out_shape=jax.ShapeDtypeStruct((1,), jnp.float32),
        grid_spec=pltpu.PrefetchScalarGridSpec(
            num_scalar_prefetch=0,
            grid=(nk,),
            in_specs=[
                _feat_in_spec(m, tk, nk),                 # streamed F tiles
                pl.BlockSpec((m, m), lambda ki: (0, 0)),  # resident target
            ],
            out_specs=pl.BlockSpec(memory_space=pltpu.SMEM),  # scalar loss only
            scratch_shapes=[pltpu.VMEM((m, m), jnp.float32)],
        ),
        compiler_params=pltpu.CompilerParams(
            dimension_semantics=("arbitrary",),
            vmem_limit_bytes=_vmem_limit_bytes(m, tk, itemsize, nk, 3)),
        cost_estimate=pl.CostEstimate(
            flops=2 * m * m * k + 3 * m * m,
            transcendentals=0,
            bytes_accessed=m * k * itemsize + 2 * m * m * 4 + 4),
    )(feats, target_gram)

    # forward() returns the input unchanged; loss is the side value.
    return x, loss[0]


class StyleLoss:
    """JAX/Pallas port of the PyTorch StyleLoss module."""

    def __init__(self, target_feature, stream_dtype=jnp.bfloat16):
        self.stream_dtype = stream_dtype
        # Target Gram is a fixed (detached) buffer, computed once at its final
        # (m, m) float32 layout — nothing to cast or pad per forward call.
        self.target = gram_matrix(target_feature, stream_dtype)
        self.loss = None

    def __call__(self, x):
        out, loss = style_loss_forward(x, self.target, self.stream_dtype)
        self.loss = loss
        return out


# ----------------------------------------------------------------------------
# Main
# ----------------------------------------------------------------------------
if __name__ == "__main__":
    key = jax.random.PRNGKey(0)
    k1, k2 = jax.random.split(key)

    # Small NCHW feature maps: batch=2, channels=4, spatial=16x16
    # -> features (a*b, c*d) = (8, 256), gram = (8, 8)
    target_feature = jax.random.normal(k1, (2, 4, 16, 16), dtype=jnp.float32)
    x = jax.random.normal(k2, (2, 4, 16, 16), dtype=jnp.float32)

    module = StyleLoss(target_feature)
    out = module(x)

    jax.block_until_ready(out)
    jax.block_until_ready(module.loss)

    # Reference mirroring the kernel numerics: bf16-streamed features,
    # f32 accumulation.
    def ref_gram_bf16(t):
        a, b, c, d = t.shape
        f = t.reshape(a * b, c * d).astype(jnp.bfloat16).astype(jnp.float32)
        return (f @ f.T) / (a * b * c * d)

    g_t = ref_gram_bf16(target_feature)
    g_x = ref_gram_bf16(x)
    ref_loss = jnp.mean((g_x - g_t) ** 2)

    assert out.shape == x.shape and out.dtype == x.dtype
    assert jnp.allclose(out, x)
    assert jnp.allclose(module.target, g_t, rtol=1e-3, atol=1e-5)
    assert jnp.allclose(module.loss, ref_loss, rtol=1e-2, atol=1e-7)

    # Coarse parity against the full-f32 (PyTorch-equivalent) reference; the
    # only deviation is the bf16 feature streaming (accumulation stays f32).
    def ref_gram_f32(t):
        a, b, c, d = t.shape
        f = t.reshape(a * b, c * d).astype(jnp.float32)
        return (f @ f.T) / (a * b * c * d)

    f32_loss = jnp.mean((ref_gram_f32(x) - ref_gram_f32(target_feature)) ** 2)
    assert jnp.allclose(module.loss, f32_loss, rtol=0.25, atol=1e-5)

    print("KERNEL_OK")
</pallas_src>

<mosaic_0001>
module attributes {stable_mosaic.version = 11 : i64} {
  func.func @_gram_kernel(%arg0: i32, %arg1: memref<8x256xbf16, #tpu.memory_space<vmem>>, %arg2: memref<8x8xf32, #tpu.memory_space<vmem>>) attributes {dimension_semantics = [#tpu.dimension_semantics<arbitrary>], iteration_bounds = array<i64: 1>, scalar_prefetch = 0 : i64, scratch_operands = 0 : i64, tpu.core_type = #tpu.core_type<tc>, window_params = [{transform_indices = @transform_0, window_bounds = array<i64: 8, 256>}, {pipeline_mode = #tpu.pipeline_mode<synchronous>, transform_indices = @transform_1, window_bounds = array<i64: 8, 8>}]} {
    %c0_i32 = arith.constant 0 : i32
    %0 = arith.cmpi eq, %arg0, %c0_i32 : i32
    %1 = arith.extui %0 : i1 to i32
    %c0_i32_0 = arith.constant 0 : i32
    %2 = arith.cmpi ne, %1, %c0_i32_0 : i32
    scf.if %2 {
      %cst_8 = arith.constant 0.000000e+00 : f32
      %11 = vector.broadcast %cst_8 : f32 to vector<8x8xf32>
      %c0_9 = arith.constant 0 : index
      %c0_10 = arith.constant 0 : index
      %12 = vector.load %arg2[%c0_9, %c0_10] : memref<8x8xf32, #tpu.memory_space<vmem>>, vector<8x8xf32>
      tpu.vector_store %arg2[%c0_9, %c0_10], %11 {strides = array<i32>} : memref<8x8xf32, #tpu.memory_space<vmem>>, vector<8x8xf32>,
    } else {
    }
    %c0 = arith.constant 0 : index
    %c0_1 = arith.constant 0 : index
    %3 = vector.load %arg1[%c0, %c0_1] : memref<8x256xbf16, #tpu.memory_space<vmem>>, vector<8x256xbf16>
    %c0_2 = arith.constant 0 : index
    %c0_3 = arith.constant 0 : index
    %4 = vector.load %arg2[%c0_2, %c0_3] : memref<8x8xf32, #tpu.memory_space<vmem>>, vector<8x8xf32>
    %cst = arith.constant dense<0.000000e+00> : vector<8x8xf32>
    %5 = tpu.matmul %3, %3, %cst {dimension_numbers = #tpu.dot_dimension_numbers<[1], [1], [0], [0], [0, 0, 1, 0], [], []>} : vector<8x256xbf16>, vector<8x256xbf16>, vector<8x8xf32> -> vector<8x8xf32>
    %6 = arith.addf %4, %5 : vector<8x8xf32>
    %c0_4 = arith.constant 0 : index
    %c0_5 = arith.constant 0 : index
    %7 = vector.load %arg2[%c0_4, %c0_5] : memref<8x8xf32, #tpu.memory_space<vmem>>, vector<8x8xf32>
    tpu.vector_store %arg2[%c0_4, %c0_5], %6 {strides = array<i32>} : memref<8x8xf32, #tpu.memory_space<vmem>>, vector<8x8xf32>,
    %c0_i32_6 = arith.constant 0 : i32
    %8 = arith.cmpi eq, %arg0, %c0_i32_6 : i32
    %9 = arith.extui %8 : i1 to i32
    %c0_i32_7 = arith.constant 0 : i32
    %10 = arith.cmpi ne, %9, %c0_i32_7 : i32
    scf.if %10 {
      %c0_8 = arith.constant 0 : index
      %c0_9 = arith.constant 0 : index
      %11 = vector.load %arg2[%c0_8, %c0_9] : memref<8x8xf32, #tpu.memory_space<vmem>>, vector<8x8xf32>
      %cst_10 = arith.constant 4.8828125E-4 : f32
      %12 = vector.broadcast %cst_10 : f32 to vector<8x8xf32>
      %13 = arith.mulf %11, %12 : vector<8x8xf32>
      %c0_11 = arith.constant 0 : index
      %c0_12 = arith.constant 0 : index
      %14 = vector.load %arg2[%c0_11, %c0_12] : memref<8x8xf32, #tpu.memory_space<vmem>>, vector<8x8xf32>
      tpu.vector_store %arg2[%c0_11, %c0_12], %13 {strides = array<i32>} : memref<8x8xf32, #tpu.memory_space<vmem>>, vector<8x8xf32>,
    } else {
    }
    return
  }
  func.func @transform_0(%arg0: i32) -> (i32, i32) {
    %c0_i32 = arith.constant 0 : i32
    %c0_i32_0 = arith.constant 0 : i32
    return %c0_i32, %arg0 : i32, i32
  }
  func.func @transform_1(%arg0: i32) -> (i32, i32) {
    %c0_i32 = arith.constant 0 : i32
    %c0_i32_0 = arith.constant 0 : i32
    %c0_i32_1 = arith.constant 0 : i32
    return %c0_i32, %c0_i32_0 : i32, i32
  }
}

</mosaic_0001>

<llo_original>
// kernel: tpu_custom_call.1
$region0: #{tpu_custom_call.1}
  #allocation0 [shape = 'u32[]', space=smem, size = 0x4, offset = 0x4, fixed_abs, tag = 'smem constant byte address 0x4 - core index']
  #allocation1 [shape = 'u32[144,128]{1,0:T(1,128)}', space=vmem, size = 0x12000, scoped, tag = 'internal scratch']
  %s0 = inlined_call_operand.hbm [shape: bf16[8,256], index: 0, kind: input, shape index: {}]
  %s1 = inlined_call_operand.hbm [shape: f32[8,8], index: 1, kind: output, shape index: {}]
  %s2 = sld [smem:[#allocation0]]
  $region26: #{tpu_custom_call.1} parent=0
    _
  %s4 = ssub.s32 1, %s2
  %s5 = scalar_select 0, %s4, %s2
  $region1: #{tpu_custom_call.1} parent=0
    #allocation2 [shape = 'u8[4096]{0}', space=vmem, size = 0x1000, scoped, tag = 'input window, operand 0, single buffered']
    #allocation3 [shape = 's32[1]{0}', space=sflag, size = 0x4, scoped, tag = 'scoped memory for tpu_custom_call.1']
    #allocation4 [shape = 's32[1]{0}', space=sflag, size = 0x4, scoped, tag = 'scoped memory for tpu_custom_call.1']
    #allocation5 [shape = 'u8[4096]{0}', space=vmem, size = 0x1000, scoped, tag = 'output window, operand 0, single buffered']
    %6 = vsyncpa [#allocation3], 0
    %7 = vsyncpa [#allocation4], 0
    // Predicated region
    $region2: #{tpu_custom_call.1} parent=1 // pred_check
      _
    $region3: #{tpu_custom_call.1} parent=1 // pred_check_branch
      %9 = sbr.rel (0) target = $region5
    $region4: #{tpu_custom_call.1} parent=1 // pred_region
      %s11 = ssub.s32 128, 128
      %12 = vsyncadd [#allocation3], %s11
      %s14 = sshll.u32 [#allocation2], 4
      %s15 = int_to_ptr.vmem [resolvable:$true] %s14
      %17 = dma.hbm_to_vmem [thread:$0]  %s0, 128, %s15, [#allocation3]
    $region5: #{tpu_custom_call.1} parent=1 // pred_fallthru
      _
    // Predicated region
    $region6: #{tpu_custom_call.1} parent=1 // pred_check
      _
    $region7: #{tpu_custom_call.1} parent=1 // pred_check_branch
      %19 = sbr.rel (0) target = $region9
    $region8: #{tpu_custom_call.1} parent=1 // pred_region
      %20 = dma.done [#allocation3], 128
    $region9: #{tpu_custom_call.1} parent=1 // pred_fallthru
      _
    %p22 = scmp.eq.s32.totalorder 0, 0
    // Predicated region
    $region10: #{tpu_custom_call.1} parent=1 // pred_check
      %p23 = pneg %p22
    $region11: #{tpu_custom_call.1} parent=1 // pred_check_branch
      %25 = sbr.rel (%p23) target = $region13
    $region12: #{tpu_custom_call.1} parent=1 // pred_region
      %vm26 = vcmask 64512
      %27 = vst.msk [vmem:[#allocation5] sm:$0xff] %vm26, 0.0
    $region13: #{tpu_custom_call.1} parent=1 // pred_fallthru
      _
    %v28 = vld [vmem:[#allocation2] sm:$0xff]
    %v29 = vld [vmem:[#allocation5] sm:$0xff]
    %v31 = vunpack.c.l.b16 %v28
    %v32 = vunpack.c.h.b16 %v28
    %v33 = vpack.c.b16 %v31, %v31
    %v34 = vpack.c.b16 %v32, %v32
    %37 = vmatprep.subr.bf16.mxu0 0
    %38 = vmatpush1.bf16.xpose.msra.mxu0 0
    %39 = vmatprep.subr.bf16.mxu0 0
    %40 = vmatpush1.bf16.xpose.msra.mxu0 0
    %41 = vmatprep.subr.bf16.mxu0 0
    %42 = vmatpush1.bf16.xpose.msra.mxu0 0
    %43 = vmatprep.subr.bf16.mxu0 0
    %44 = vmatpush1.bf16.xpose.msra.mxu0 0
    %45 = vmatprep.subr.bf16.mxu0 0
    %46 = vmatpush1.bf16.xpose.msra.mxu0 0
    %47 = vmatprep.subr.bf16.mxu0 0
    %48 = vmatpush1.bf16.xpose.msra.mxu0 0
    %49 = vmatprep.subr.bf16.mxu0 0
    %50 = vmatpush1.bf16.xpose.msra.mxu0 0
    %51 = vmatprep.subr.bf16.mxu0 %v34
    %52 = vmatpush1.bf16.xpose.msra.mxu0 %v33
    %53 = vmatprep.subr.bf16.mxu0 0
    %54 = vmatpush2.bf16.xpose.msra.mxu0 0
    %55 = vmatprep.subr.bf16.mxu0 0
    %56 = vmatpush2.bf16.xpose.msra.mxu0 0
    %57 = vmatprep.subr.bf16.mxu0 0
    %58 = vmatpush2.bf16.xpose.msra.mxu0 0
    %59 = vmatprep.subr.bf16.mxu0 0
    %60 = vmatpush2.bf16.xpose.msra.mxu0 0
    %61 = vmatprep.subr.bf16.mxu0 0
    %62 = vmatpush2.bf16.xpose.msra.mxu0 0
    %63 = vmatprep.subr.bf16.mxu0 0
    %64 = vmatpush2.bf16.xpose.msra.mxu0 0
    %65 = vmatprep.subr.bf16.mxu0 0
    %66 = vmatpush2.bf16.xpose.msra.mxu0 0
    %67 = vmatprep.subr.bf16.mxu0 0
    %68 = vmatpush2.bf16.xpose.msra.mxu0 0
    %69 = vmatprep.mubr.bf16.mxu0 %v34
    %70 = vmatmul.mubr.bf16.gmra.mxu0 %v33
    %v71 = vpop.f32.mrf.mxu0
    %v72 = vadd.f32 0.0, %v71
    %v73 = vpop.f32.mrf.mxu0
    %v74 = vpop.f32.mrf.mxu0
    %v75 = vpop.f32.mrf.mxu0
    %76 = vdwg.mxu0
    %v77 = vadd.f32 %v29, %v72
    %vm78 = vcmask 64512
    %79 = vst.msk [vmem:[#allocation5] sm:$0xff] %vm78, %v77
    // Predicated region
    $region14: #{tpu_custom_call.1} parent=1 // pred_check
      %p80 = pneg %p22
    $region15: #{tpu_custom_call.1} parent=1 // pred_check_branch
      %82 = sbr.rel (%p80) target = $region17
    $region16: #{tpu_custom_call.1} parent=1 // pred_region
      %v83 = vld [vmem:[#allocation5] sm:$0xff]
      %v84 = vmul.f32 %v83, 0.00048828125
      %85 = vst.msk [vmem:[#allocation5] sm:$0xff] %vm78, %v84
    $region17: #{tpu_custom_call.1} parent=1 // pred_fallthru
      _
    // Predicated region
    $region18: #{tpu_custom_call.1} parent=1 // pred_check
      _
    $region19: #{tpu_custom_call.1} parent=1 // pred_check_branch
      %87 = sbr.rel (0) target = $region21
    $region20: #{tpu_custom_call.1} parent=1 // pred_region
      %s89 = ssub.s32 128, 128
      %90 = vsyncadd [#allocation4], %s89
      %s92 = sshll.u32 [#allocation5], 4
      %s93 = int_to_ptr.vmem [resolvable:$true] %s92
      %95 = dma.vmem_to_hbm [thread:$0]  %s93, 128, %s1, [#allocation4]
    $region21: #{tpu_custom_call.1} parent=1 // pred_fallthru
      _
    // Predicated region
    $region22: #{tpu_custom_call.1} parent=1 // pred_check
      _
    $region23: #{tpu_custom_call.1} parent=1 // pred_check_branch
      %97 = sbr.rel (0) target = $region25
    $region24: #{tpu_custom_call.1} parent=1 // pred_region
      %98 = dma.done [#allocation4], 128
    $region25: #{tpu_custom_call.1} parent=1 // pred_fallthru
      _
    %99 = vsyncpa [#allocation3], 1
    %100 = vsyncpa [#allocation4], 1

</llo_original>
